<compile_context>
chip_gen: v5e
topology: v5e:2x2
jax: 0.10.0
libtpu: 0.0.40
codegen_flags: <defaults>
</compile_context>

<pallas_src>
import jax
import jax.numpy as jnp
from jax.experimental import pallas as pl
from jax.experimental.pallas import tpu as pltpu

N_STATES = 2
N_ACTIONS = 6
HIDDEN = 32
N_LAYERS = 5            # fc1..fc4 + out
LANES = 128             # lane-padded hidden / weight width
BIAS_ROWS = 8           # sublane-padded bias slab rows (>= N_LAYERS)
OUT_W = 8               # narrow lane-padded output width (>= N_ACTIONS)

TM_MAX = 2048           # max batch tile (rows); footprint stays far under VMEM
PALLAS_MIN_BATCH = 128  # below this, plain XLA beats the kernel launch cost


def _round_up(x, m):
    return ((x + m - 1) // m) * m


def mlp_kernel(x_ref, w_ref, b_ref, out_ref):
    """All five layers fused; parameters stay resident in VMEM.

    x_ref:   (TM, 2)        f32
    w_ref:   (5, 128, 128)  bf16 -- slot i holds Wi^T in [:in_i, :out_i], zero pad
    b_ref:   (8, 128)       f32  -- row i holds bi in [:out_i], zero pad
    out_ref: (TM, 8)        f32  -- Q-values in lanes [:N_ACTIONS]
    """
    x = x_ref[...]                                            # (TM, 2) f32

    # Layer 1 on the VPU: a (TM,2) LHS would waste ~98% of an MXU pass, so do
    # two broadcast FMAs against the two (1,128) weight rows instead.
    h = (x[:, 0:1] * w_ref[0, 0:1, :].astype(jnp.float32)
         + x[:, 1:2] * w_ref[0, 1:2, :].astype(jnp.float32)
         + b_ref[0:1, :])
    h = jnp.maximum(h, 0.0)            # (TM, 128) f32; lanes >= HIDDEN stay 0

    # Hidden layers 2..4: full 128-lane bf16 MXU passes, f32 accumulation.
    # Zero-padded weight rows/columns keep lanes >= HIDDEN identically zero.
    for i in (1, 2, 3):
        h = jnp.dot(h.astype(jnp.bfloat16), w_ref[i],
                    preferred_element_type=jnp.float32)
        h = jnp.maximum(h + b_ref[i:i + 1, :], 0.0)

    # Output layer; store only the first OUT_W lanes (narrow HBM writeback).
    out = jnp.dot(h.astype(jnp.bfloat16), w_ref[4],
                  preferred_element_type=jnp.float32)
    out = out + b_ref[4:5, :]
    out_ref[...] = out[:, 0:OUT_W].astype(out_ref.dtype)


def pack_params(params):
    """One-time packing of PyTorch-layout params into two lane-padded slabs."""
    w_slab = jnp.zeros((N_LAYERS, LANES, LANES), jnp.float32)
    b_slab = jnp.zeros((BIAS_ROWS, LANES), jnp.float32)
    for i, name in enumerate(("fc1", "fc2", "fc3", "fc4", "out")):
        W, b = params[name]                    # W: (out_f, in_f), b: (out_f,)
        Wt = jnp.asarray(W, jnp.float32).T     # (in_f, out_f)
        in_f, out_f = Wt.shape
        w_slab = w_slab.at[i, :in_f, :out_f].set(Wt)
        b_slab = b_slab.at[i, :out_f].set(jnp.asarray(b, jnp.float32))
    # Weights bf16 (MXU-native, half the DMA bytes); biases stay f32.
    return w_slab.astype(jnp.bfloat16), b_slab


def _pick_tile(B):
    """Batch tile + padded batch. Big tiles amortize per-step overhead; keep
    >= 2 grid steps for moderate/large batches so v7x shards over both TCs."""
    b8 = _round_up(max(B, 1), 8)
    if b8 <= 256:
        return b8, b8                               # single small tile
    tm = min(TM_MAX, _round_up(pl.cdiv(b8, 2), 8))  # >= 2 steps when possible
    b_pad = _round_up(b8, tm)
    return tm, b_pad


@jax.jit
def _pallas_forward(x, w_slab, b_slab):
    B = x.shape[0]
    tm, b_pad = _pick_tile(B)
    if b_pad != B:
        x = jnp.pad(x, ((0, b_pad - B), (0, 0)))

    out = pl.pallas_call(
        mlp_kernel,
        out_shape=jax.ShapeDtypeStruct((b_pad, OUT_W), jnp.float32),
        grid=(b_pad // tm,),
        in_specs=[
            pl.BlockSpec((tm, N_STATES), lambda i: (i, 0)),
            # Constant parameter slabs: untiled, resident in VMEM for the whole
            # call (no per-step re-DMA, no double buffering).
            pl.BlockSpec(memory_space=pltpu.MemorySpace.VMEM),
            pl.BlockSpec(memory_space=pltpu.MemorySpace.VMEM),
        ],
        out_specs=pl.BlockSpec((tm, OUT_W), lambda i: (i, 0)),
        compiler_params=pltpu.CompilerParams(
            dimension_semantics=("parallel",),
            vmem_limit_bytes=32 * 1024 * 1024,
        ),
    )(x, w_slab, b_slab)

    return out[:B, :N_ACTIONS]


@jax.jit
def _xla_forward(x, w_slab, b_slab):
    """Plain-XLA path for tiny (acting-sized) batches."""
    w = w_slab.astype(jnp.float32)
    h = jnp.maximum(x @ w[0, :N_STATES, :HIDDEN] + b_slab[0, :HIDDEN], 0.0)
    for i in (1, 2, 3):
        h = jnp.maximum(h @ w[i, :HIDDEN, :HIDDEN] + b_slab[i, :HIDDEN], 0.0)
    return h @ w[4, :HIDDEN, :N_ACTIONS] + b_slab[4, :N_ACTIONS]


def net_forward(x, w_slab, b_slab, *, force_pallas=False):
    """x: (B, N_STATES) float32; slabs from pack_params(). Returns (B, N_ACTIONS)."""
    x = jnp.asarray(x, jnp.float32)
    if x.shape[0] < PALLAS_MIN_BATCH and not force_pallas:
        return _xla_forward(x, w_slab, b_slab)
    return _pallas_forward(x, w_slab, b_slab)


def init_params(key):
    """Deterministic init matching the PyTorch module's shapes.

    Weights ~ N(0, 0.1); biases use PyTorch Linear default U(-1/sqrt(fan_in), +).
    """
    layer_dims = {
        "fc1": (HIDDEN, N_STATES),
        "fc2": (HIDDEN, HIDDEN),
        "fc3": (HIDDEN, HIDDEN),
        "fc4": (HIDDEN, HIDDEN),
        "out": (N_ACTIONS, HIDDEN),
    }
    params = {}
    for name, (out_f, in_f) in layer_dims.items():
        key, kw, kb = jax.random.split(key, 3)
        W = 0.1 * jax.random.normal(kw, (out_f, in_f), dtype=jnp.float32)
        bound = 1.0 / jnp.sqrt(float(in_f))
        b = jax.random.uniform(kb, (out_f,), minval=-bound, maxval=bound,
                               dtype=jnp.float32)
        params[name] = (W, b)
    return params


def reference_forward(x, params):
    h = x
    for name in ("fc1", "fc2", "fc3", "fc4"):
        W, b = params[name]
        h = jnp.maximum(h @ W.T + b, 0.0)
    W, b = params["out"]
    return h @ W.T + b


if __name__ == "__main__":
    key = jax.random.PRNGKey(0)
    key, kx_small, kx_big = jax.random.split(key, 3)
    params = init_params(key)

    # Packing is hoisted out of the forward path (done once, like a param store).
    w_slab, b_slab = pack_params(params)

    # Small batch, forced through the Pallas kernel (single-tile grid).
    B_small = 8
    x_small = jax.random.normal(kx_small, (B_small, N_STATES), dtype=jnp.float32)
    out_small = jax.block_until_ready(
        net_forward(x_small, w_slab, b_slab, force_pallas=True))
    ref_small = reference_forward(x_small, params)
    assert out_small.shape == (B_small, N_ACTIONS)
    # bf16 weights/activations -> loosened tolerance vs. f32 reference.
    assert jnp.allclose(out_small, ref_small, atol=2e-2, rtol=2e-2), \
        "small-batch mismatch vs reference"

    # Training-batch path: row padding + 2-step parallel grid (dual-TC on v7x).
    B_big = 500
    x_big = jax.random.normal(kx_big, (B_big, N_STATES), dtype=jnp.float32)
    out_big = jax.block_until_ready(net_forward(x_big, w_slab, b_slab))
    ref_big = reference_forward(x_big, params)
    assert out_big.shape == (B_big, N_ACTIONS)
    assert jnp.allclose(out_big, ref_big, atol=2e-2, rtol=2e-2), \
        "large-batch mismatch vs reference"

    # Tiny-batch dispatcher takes the plain-XLA fallback path.
    out_fb = jax.block_until_ready(net_forward(x_small, w_slab, b_slab))
    assert jnp.allclose(out_fb, ref_small, atol=2e-2, rtol=2e-2), \
        "XLA fallback mismatch vs reference"

    print("KERNEL_OK")
</pallas_src>

<mosaic_0001>
module attributes {stable_mosaic.version = 11 : i64} {
  func.func @mlp_kernel(%arg0: i32, %arg1: memref<8x2xf32, #tpu.memory_space<vmem>>, %arg2: memref<5x128x128xbf16, #tpu.memory_space<vmem>>, %arg3: memref<8x128xf32, #tpu.memory_space<vmem>>, %arg4: memref<8x8xf32, #tpu.memory_space<vmem>>) attributes {dimension_semantics = [#tpu.dimension_semantics<parallel>], iteration_bounds = array<i64: 1>, scalar_prefetch = 0 : i64, scratch_operands = 0 : i64, tpu.core_type = #tpu.core_type<tc>, window_params = [{transform_indices = @transform_0, window_bounds = array<i64: 8, 2>}, {pipeline_mode = #tpu.pipeline_mode<synchronous>, transform_indices = @transform_1, window_bounds = array<i64: 5, 128, 128>}, {pipeline_mode = #tpu.pipeline_mode<synchronous>, transform_indices = @transform_2, window_bounds = array<i64: 8, 128>}, {transform_indices = @transform_3, window_bounds = array<i64: 8, 8>}]} {
    %c0 = arith.constant 0 : index
    %c0_0 = arith.constant 0 : index
    %0 = vector.load %arg1[%c0, %c0_0] : memref<8x2xf32, #tpu.memory_space<vmem>>, vector<8x2xf32>
    %1 = vector.extract_strided_slice %0 {offsets = [0, 0], sizes = [8, 1], strides = [1, 1]} : vector<8x2xf32> to vector<8x1xf32>
    %c0_1 = arith.constant 0 : index
    %c0_2 = arith.constant 0 : index
    %c0_3 = arith.constant 0 : index
    %2 = vector.load %arg2[%c0_1, %c0_2, %c0_3] : memref<5x128x128xbf16, #tpu.memory_space<vmem>>, vector<1x1x128xbf16>
    %3 = vector.shape_cast %2 : vector<1x1x128xbf16> to vector<1x128xbf16>
    %4 = arith.extf %3 : vector<1x128xbf16> to vector<1x128xf32>
    %5 = vector.broadcast %1 : vector<8x1xf32> to vector<8x128xf32>
    %6 = vector.broadcast %4 : vector<1x128xf32> to vector<8x128xf32>
    %7 = arith.mulf %5, %6 : vector<8x128xf32>
    %8 = vector.extract_strided_slice %0 {offsets = [0, 1], sizes = [8, 1], strides = [1, 1]} : vector<8x2xf32> to vector<8x1xf32>
    %c0_4 = arith.constant 0 : index
    %c1 = arith.constant 1 : index
    %c0_5 = arith.constant 0 : index
    %9 = vector.load %arg2[%c0_4, %c1, %c0_5] : memref<5x128x128xbf16, #tpu.memory_space<vmem>>, vector<1x1x128xbf16>
    %10 = vector.shape_cast %9 : vector<1x1x128xbf16> to vector<1x128xbf16>
    %11 = arith.extf %10 : vector<1x128xbf16> to vector<1x128xf32>
    %12 = vector.broadcast %8 : vector<8x1xf32> to vector<8x128xf32>
    %13 = vector.broadcast %11 : vector<1x128xf32> to vector<8x128xf32>
    %14 = arith.mulf %12, %13 : vector<8x128xf32>
    %15 = arith.addf %7, %14 : vector<8x128xf32>
    %c0_6 = arith.constant 0 : index
    %c0_7 = arith.constant 0 : index
    %16 = vector.load %arg3[%c0_6, %c0_7] : memref<8x128xf32, #tpu.memory_space<vmem>>, vector<1x128xf32>
    %17 = vector.broadcast %16 : vector<1x128xf32> to vector<8x128xf32>
    %18 = arith.addf %15, %17 : vector<8x128xf32>
    %cst = arith.constant 0.000000e+00 : f32
    %19 = vector.broadcast %cst : f32 to vector<8x128xf32>
    %20 = arith.maximumf %18, %19 : vector<8x128xf32>
    %21 = arith.truncf %20 : vector<8x128xf32> to vector<8x128xbf16>
    %c1_8 = arith.constant 1 : index
    %c0_9 = arith.constant 0 : index
    %c0_10 = arith.constant 0 : index
    %22 = vector.load %arg2[%c1_8, %c0_9, %c0_10] : memref<5x128x128xbf16, #tpu.memory_space<vmem>>, vector<1x128x128xbf16>
    %23 = vector.shape_cast %22 : vector<1x128x128xbf16> to vector<128x128xbf16>
    %cst_11 = arith.constant dense<0.000000e+00> : vector<8x128xf32>
    %24 = tpu.matmul %21, %23, %cst_11 {dimension_numbers = #tpu.dot_dimension_numbers<[1], [0], [0], [1], [0, 0, 1, 1], [], []>} : vector<8x128xbf16>, vector<128x128xbf16>, vector<8x128xf32> -> vector<8x128xf32>
    %c1_12 = arith.constant 1 : index
    %c0_13 = arith.constant 0 : index
    %25 = vector.load %arg3[%c1_12, %c0_13] : memref<8x128xf32, #tpu.memory_space<vmem>>, vector<1x128xf32>
    %26 = vector.broadcast %25 : vector<1x128xf32> to vector<8x128xf32>
    %27 = arith.addf %24, %26 : vector<8x128xf32>
    %cst_14 = arith.constant 0.000000e+00 : f32
    %28 = vector.broadcast %cst_14 : f32 to vector<8x128xf32>
    %29 = arith.maximumf %27, %28 : vector<8x128xf32>
    %30 = arith.truncf %29 : vector<8x128xf32> to vector<8x128xbf16>
    %c2 = arith.constant 2 : index
    %c0_15 = arith.constant 0 : index
    %c0_16 = arith.constant 0 : index
    %31 = vector.load %arg2[%c2, %c0_15, %c0_16] : memref<5x128x128xbf16, #tpu.memory_space<vmem>>, vector<1x128x128xbf16>
    %32 = vector.shape_cast %31 : vector<1x128x128xbf16> to vector<128x128xbf16>
    %cst_17 = arith.constant dense<0.000000e+00> : vector<8x128xf32>
    %33 = tpu.matmul %30, %32, %cst_17 {dimension_numbers = #tpu.dot_dimension_numbers<[1], [0], [0], [1], [0, 0, 1, 1], [], []>} : vector<8x128xbf16>, vector<128x128xbf16>, vector<8x128xf32> -> vector<8x128xf32>
    %c2_18 = arith.constant 2 : index
    %c0_19 = arith.constant 0 : index
    %34 = vector.load %arg3[%c2_18, %c0_19] : memref<8x128xf32, #tpu.memory_space<vmem>>, vector<1x128xf32>
    %35 = vector.broadcast %34 : vector<1x128xf32> to vector<8x128xf32>
    %36 = arith.addf %33, %35 : vector<8x128xf32>
    %cst_20 = arith.constant 0.000000e+00 : f32
    %37 = vector.broadcast %cst_20 : f32 to vector<8x128xf32>
    %38 = arith.maximumf %36, %37 : vector<8x128xf32>
    %39 = arith.truncf %38 : vector<8x128xf32> to vector<8x128xbf16>
    %c3 = arith.constant 3 : index
    %c0_21 = arith.constant 0 : index
    %c0_22 = arith.constant 0 : index
    %40 = vector.load %arg2[%c3, %c0_21, %c0_22] : memref<5x128x128xbf16, #tpu.memory_space<vmem>>, vector<1x128x128xbf16>
    %41 = vector.shape_cast %40 : vector<1x128x128xbf16> to vector<128x128xbf16>
    %cst_23 = arith.constant dense<0.000000e+00> : vector<8x128xf32>
    %42 = tpu.matmul %39, %41, %cst_23 {dimension_numbers = #tpu.dot_dimension_numbers<[1], [0], [0], [1], [0, 0, 1, 1], [], []>} : vector<8x128xbf16>, vector<128x128xbf16>, vector<8x128xf32> -> vector<8x128xf32>
    %c3_24 = arith.constant 3 : index
    %c0_25 = arith.constant 0 : index
    %43 = vector.load %arg3[%c3_24, %c0_25] : memref<8x128xf32, #tpu.memory_space<vmem>>, vector<1x128xf32>
    %44 = vector.broadcast %43 : vector<1x128xf32> to vector<8x128xf32>
    %45 = arith.addf %42, %44 : vector<8x128xf32>
    %cst_26 = arith.constant 0.000000e+00 : f32
    %46 = vector.broadcast %cst_26 : f32 to vector<8x128xf32>
    %47 = arith.maximumf %45, %46 : vector<8x128xf32>
    %48 = arith.truncf %47 : vector<8x128xf32> to vector<8x128xbf16>
    %c4 = arith.constant 4 : index
    %c0_27 = arith.constant 0 : index
    %c0_28 = arith.constant 0 : index
    %49 = vector.load %arg2[%c4, %c0_27, %c0_28] : memref<5x128x128xbf16, #tpu.memory_space<vmem>>, vector<1x128x128xbf16>
    %50 = vector.shape_cast %49 : vector<1x128x128xbf16> to vector<128x128xbf16>
    %cst_29 = arith.constant dense<0.000000e+00> : vector<8x128xf32>
    %51 = tpu.matmul %48, %50, %cst_29 {dimension_numbers = #tpu.dot_dimension_numbers<[1], [0], [0], [1], [0, 0, 1, 1], [], []>} : vector<8x128xbf16>, vector<128x128xbf16>, vector<8x128xf32> -> vector<8x128xf32>
    %c4_30 = arith.constant 4 : index
    %c0_31 = arith.constant 0 : index
    %52 = vector.load %arg3[%c4_30, %c0_31] : memref<8x128xf32, #tpu.memory_space<vmem>>, vector<1x128xf32>
    %53 = vector.broadcast %52 : vector<1x128xf32> to vector<8x128xf32>
    %54 = arith.addf %51, %53 : vector<8x128xf32>
    %55 = vector.extract_strided_slice %54 {offsets = [0, 0], sizes = [8, 8], strides = [1, 1]} : vector<8x128xf32> to vector<8x8xf32>
    %c0_32 = arith.constant 0 : index
    %c0_33 = arith.constant 0 : index
    %56 = vector.load %arg4[%c0_32, %c0_33] : memref<8x8xf32, #tpu.memory_space<vmem>>, vector<8x8xf32>
    tpu.vector_store %arg4[%c0_32, %c0_33], %55 {strides = array<i32>} : memref<8x8xf32, #tpu.memory_space<vmem>>, vector<8x8xf32>,
    return
  }
  func.func @transform_0(%arg0: i32) -> (i32, i32) {
    %c0_i32 = arith.constant 0 : i32
    %c0_i32_0 = arith.constant 0 : i32
    return %arg0, %c0_i32 : i32, i32
  }
  func.func @transform_1(%arg0: i32) -> (i32, i32, i32) {
    %c0_i32 = arith.constant 0 : i32
    %c0_i32_0 = arith.constant 0 : i32
    %c0_i32_1 = arith.constant 0 : i32
    %c0_i32_2 = arith.constant 0 : i32
    return %c0_i32, %c0_i32_0, %c0_i32_1 : i32, i32, i32
  }
  func.func @transform_2(%arg0: i32) -> (i32, i32) {
    %c0_i32 = arith.constant 0 : i32
    %c0_i32_0 = arith.constant 0 : i32
    %c0_i32_1 = arith.constant 0 : i32
    return %c0_i32, %c0_i32_0 : i32, i32
  }
  func.func @transform_3(%arg0: i32) -> (i32, i32) {
    %c0_i32 = arith.constant 0 : i32
    %c0_i32_0 = arith.constant 0 : i32
    return %arg0, %c0_i32 : i32, i32
  }
}

</mosaic_0001>

<llo_original>
// kernel: _pallas_forward.1
$region0: #{_pallas_forward.1}
  #allocation0 [shape = 'u32[]', space=smem, size = 0x4, offset = 0x4, fixed_abs, tag = 'smem constant byte address 0x4 - core index']
  #allocation1 [shape = 'u32[72,128]{1,0:T(1,128)}', space=vmem, size = 0x9000, scoped, tag = 'internal scratch']
  %s0 = inlined_call_operand.vmem [shape: f32[8,2], index: 0, kind: input, shape index: {}]
  %s1 = inlined_call_operand.hbm [shape: bf16[5,128,128], index: 1, kind: input, shape index: {}]
  %s2 = inlined_call_operand.vmem [shape: f32[8,128], index: 2, kind: input, shape index: {}]
  %s3 = inlined_call_operand.hbm [shape: f32[8,8], index: 3, kind: output, shape index: {}]
  %s4 = sld [smem:[#allocation0]]
  $region26: #{_pallas_forward.1} parent=0
    _
  %s6 = ssub.s32 1, %s4
  %s7 = scalar_select 0, %s6, %s4
  $region1: #{_pallas_forward.1} parent=0
    #allocation2 [shape = 'u8[163840]{0}', space=vmem, size = 0x28000, scoped, tag = 'input window, operand 1, single buffered']
    #allocation3 [shape = 's32[1]{0}', space=sflag, size = 0x4, scoped, tag = 'scoped memory for _pallas_forward.1']
    #allocation4 [shape = 's32[1]{0}', space=sflag, size = 0x4, scoped, tag = 'scoped memory for _pallas_forward.1']
    #allocation5 [shape = 'u8[4096]{0}', space=vmem, size = 0x1000, scoped, tag = 'output window, operand 0, single buffered']
    %8 = vsyncpa [#allocation3], 0
    %9 = vsyncpa [#allocation4], 0
    // Predicated region
    $region2: #{_pallas_forward.1} parent=1 // pred_check
      _
    $region3: #{_pallas_forward.1} parent=1 // pred_check_branch
      %11 = sbr.rel (0) target = $region5
    $region4: #{_pallas_forward.1} parent=1 // pred_region
      _
    $region5: #{_pallas_forward.1} parent=1 // pred_fallthru
      _
    // Predicated region
    $region6: #{_pallas_forward.1} parent=1 // pred_check
      _
    $region7: #{_pallas_forward.1} parent=1 // pred_check_branch
      %13 = sbr.rel (0) target = $region9
    $region8: #{_pallas_forward.1} parent=1 // pred_region
      %15 = vsyncadd [#allocation3], 0
      %s16 = sshll.u32 %s1, 4
      %s17 = int_to_ptr.hbm [resolvable:$true] %s16
      %s18 = sshll.u32 [#allocation2], 4
      %s19 = int_to_ptr.vmem [resolvable:$true] %s18
      %24 = dma.hbm_to_vmem [thread:$0]  %s17, 5120, %s19, [#allocation3], 64, 64, 4
    $region9: #{_pallas_forward.1} parent=1 // pred_fallthru
      _
    // Predicated region
    $region10: #{_pallas_forward.1} parent=1 // pred_check
      _
    $region11: #{_pallas_forward.1} parent=1 // pred_check_branch
      %26 = sbr.rel (0) target = $region13
    $region12: #{_pallas_forward.1} parent=1 // pred_region
      _
    $region13: #{_pallas_forward.1} parent=1 // pred_fallthru
      _
    // Predicated region
    $region14: #{_pallas_forward.1} parent=1 // pred_check
      _
    $region15: #{_pallas_forward.1} parent=1 // pred_check_branch
      %28 = sbr.rel (0) target = $region17
    $region16: #{_pallas_forward.1} parent=1 // pred_region
      %30 = dma.done [#allocation3], 5120
    $region17: #{_pallas_forward.1} parent=1 // pred_fallthru
      _
    %v31 = vld [vmem:[%s0] sm:$0xff]
    %v32 = vld [vmem:[#allocation2] sm:$0x1]
    %v33 = vunpack.c.l.bf16 %v32
    %35 = vset.pattern.permute.xlu0 0
    %36 = vperm.xlu0 %35, %v31
    %v37 = vpop.permute.xlu0 %36
    %v39 = vperm.slane %v33, 0
    %v40 = vmul.f32 %v37, %v39
    %41 = vset.pattern.permute.xlu0 1
    %42 = vperm.xlu0 %41, %v31
    %v43 = vpop.permute.xlu0 %42
    %v45 = vperm.slane %v33, 1
    %v46 = vmul.f32 %v43, %v45
    %v47 = vadd.f32 %v40, %v46
    %v48 = vld [vmem:[%s2] sm:$0x1]
    %v49 = vperm.slane %v48, 0
    %v50 = vadd.f32 %v47, %v49
    %v51 = vmax.f32 %v50, 0.0
    %v52 = vpack.c.bf16 %v51, %v51
    %s53 = scalar_lea.vmem [#allocation2], 64
    %v54 = vld [vmem:[%s53] sm:$0xf]
    %v55 = vld [vmem:[%s53 + $0x4] sm:$0xf]
    %v56 = vld [vmem:[%s53 + $0x8] sm:$0xf]
    %v57 = vld [vmem:[%s53 + $0xc] sm:$0xf]
    %v58 = vld [vmem:[%s53 + $0x10] sm:$0xf]
    %v59 = vld [vmem:[%s53 + $0x14] sm:$0xf]
    %v60 = vld [vmem:[%s53 + $0x18] sm:$0xf]
    %v61 = vld [vmem:[%s53 + $0x1c] sm:$0xf]
    %v62 = vld [vmem:[%s53 + $0x20] sm:$0xf]
    %v63 = vld [vmem:[%s53 + $0x24] sm:$0xf]
    %v64 = vld [vmem:[%s53 + $0x28] sm:$0xf]
    %v65 = vld [vmem:[%s53 + $0x2c] sm:$0xf]
    %v66 = vld [vmem:[%s53 + $0x30] sm:$0xf]
    %v67 = vld [vmem:[%s53 + $0x34] sm:$0xf]
    %v68 = vld [vmem:[%s53 + $0x38] sm:$0xf]
    %v69 = vld [vmem:[%s53 + $0x3c] sm:$0xf]
    %v70 = vld [vmem:[%s2 + $0x1] sm:$0x1]
    %v71 = vperm.slane %v70, 0
    %v88 = vunpack.c.l.b16 %v54
    %v89 = vunpack.c.l.b16 %v55
    %v90 = vunpack.c.l.b16 %v56
    %v91 = vunpack.c.l.b16 %v57
    %v92 = vunpack.c.l.b16 %v58
    %v93 = vunpack.c.l.b16 %v59
    %v94 = vunpack.c.l.b16 %v60
    %v95 = vunpack.c.l.b16 %v61
    %v96 = vunpack.c.l.b16 %v62
    %v97 = vunpack.c.l.b16 %v63
    %v98 = vunpack.c.l.b16 %v64
    %v99 = vunpack.c.l.b16 %v65
    %v100 = vunpack.c.l.b16 %v66
    %v101 = vunpack.c.l.b16 %v67
    %v102 = vunpack.c.l.b16 %v68
    %v103 = vunpack.c.l.b16 %v69
    %v104 = vpack.c.b16 %v89, %v88
    %v105 = vpack.c.b16 %v91, %v90
    %v106 = vpack.c.b16 %v93, %v92
    %v107 = vpack.c.b16 %v95, %v94
    %v108 = vpack.c.b16 %v97, %v96
    %v109 = vpack.c.b16 %v99, %v98
    %v110 = vpack.c.b16 %v101, %v100
    %v111 = vpack.c.b16 %v103, %v102
    %120 = vmatpush.bf16.msra.mxu0 %v111
    %121 = vmatpush.bf16.msra.mxu0 %v110
    %122 = vmatpush.bf16.msra.mxu0 %v109
    %123 = vmatpush.bf16.msra.mxu0 %v108
    %124 = vmatpush.bf16.msra.mxu0 %v107
    %125 = vmatpush.bf16.msra.mxu0 %v106
    %126 = vmatpush.bf16.msra.mxu0 %v105
    %127 = vmatpush.bf16.msra.mxu0 %v104
    %128 = vmatmul.bf16.gmra.mxu0 %v52
    %v129 = vpop.f32.mrf.mxu0
    %v130 = vadd.f32 %v71, %v129
    %v131 = vpop.f32.mrf.mxu0
    %132 = vdwg.mxu0
    %v133 = vmax.f32 %v130, 0.0
    %v134 = vpack.c.bf16 %v133, %v133
    %s135 = scalar_lea.vmem [#allocation2], 128
    %v136 = vld [vmem:[%s135] sm:$0xf]
    %v137 = vld [vmem:[%s135 + $0x4] sm:$0xf]
    %v138 = vld [vmem:[%s135 + $0x8] sm:$0xf]
    %v139 = vld [vmem:[%s135 + $0xc] sm:$0xf]
    %v140 = vld [vmem:[%s135 + $0x10] sm:$0xf]
    %v141 = vld [vmem:[%s135 + $0x14] sm:$0xf]
    %v142 = vld [vmem:[%s135 + $0x18] sm:$0xf]
    %v143 = vld [vmem:[%s135 + $0x1c] sm:$0xf]
    %v144 = vld [vmem:[%s135 + $0x20] sm:$0xf]
    %v145 = vld [vmem:[%s135 + $0x24] sm:$0xf]
    %v146 = vld [vmem:[%s135 + $0x28] sm:$0xf]
    %v147 = vld [vmem:[%s135 + $0x2c] sm:$0xf]
    %v148 = vld [vmem:[%s135 + $0x30] sm:$0xf]
    %v149 = vld [vmem:[%s135 + $0x34] sm:$0xf]
    %v150 = vld [vmem:[%s135 + $0x38] sm:$0xf]
    %v151 = vld [vmem:[%s135 + $0x3c] sm:$0xf]
    %v152 = vld [vmem:[%s2 + $0x2] sm:$0x1]
    %v153 = vperm.slane %v152, 0
    %v170 = vunpack.c.l.b16 %v136
    %v171 = vunpack.c.l.b16 %v137
    %v172 = vunpack.c.l.b16 %v138
    %v173 = vunpack.c.l.b16 %v139
    %v174 = vunpack.c.l.b16 %v140
    %v175 = vunpack.c.l.b16 %v141
    %v176 = vunpack.c.l.b16 %v142
    %v177 = vunpack.c.l.b16 %v143
    %v178 = vunpack.c.l.b16 %v144
    %v179 = vunpack.c.l.b16 %v145
    %v180 = vunpack.c.l.b16 %v146
    %v181 = vunpack.c.l.b16 %v147
    %v182 = vunpack.c.l.b16 %v148
    %v183 = vunpack.c.l.b16 %v149
    %v184 = vunpack.c.l.b16 %v150
    %v185 = vunpack.c.l.b16 %v151
    %v186 = vpack.c.b16 %v171, %v170
    %v187 = vpack.c.b16 %v173, %v172
    %v188 = vpack.c.b16 %v175, %v174
    %v189 = vpack.c.b16 %v177, %v176
    %v190 = vpack.c.b16 %v179, %v178
    %v191 = vpack.c.b16 %v181, %v180
    %v192 = vpack.c.b16 %v183, %v182
    %v193 = vpack.c.b16 %v185, %v184
    %202 = vmatpush.bf16.msra.mxu0 %v193
    %203 = vmatpush.bf16.msra.mxu0 %v192
    %204 = vmatpush.bf16.msra.mxu0 %v191
    %205 = vmatpush.bf16.msra.mxu0 %v190
    %206 = vmatpush.bf16.msra.mxu0 %v189
    %207 = vmatpush.bf16.msra.mxu0 %v188
    %208 = vmatpush.bf16.msra.mxu0 %v187
    %209 = vmatpush.bf16.msra.mxu0 %v186
    %210 = vmatmul.bf16.gmra.mxu0 %v134
    %v211 = vpop.f32.mrf.mxu0
    %v212 = vadd.f32 %v153, %v211
    %v213 = vpop.f32.mrf.mxu0
    %214 = vdwg.mxu0
    %v215 = vmax.f32 %v212, 0.0
    %v216 = vpack.c.bf16 %v215, %v215
    %s217 = scalar_lea.vmem [#allocation2], 192
    %v218 = vld [vmem:[%s217] sm:$0xf]
    %v219 = vld [vmem:[%s217 + $0x4] sm:$0xf]
    %v220 = vld [vmem:[%s217 + $0x8] sm:$0xf]
    %v221 = vld [vmem:[%s217 + $0xc] sm:$0xf]
    %v222 = vld [vmem:[%s217 + $0x10] sm:$0xf]
    %v223 = vld [vmem:[%s217 + $0x14] sm:$0xf]
    %v224 = vld [vmem:[%s217 + $0x18] sm:$0xf]
    %v225 = vld [vmem:[%s217 + $0x1c] sm:$0xf]
    %v226 = vld [vmem:[%s217 + $0x20] sm:$0xf]
    %v227 = vld [vmem:[%s217 + $0x24] sm:$0xf]
    %v228 = vld [vmem:[%s217 + $0x28] sm:$0xf]
    %v229 = vld [vmem:[%s217 + $0x2c] sm:$0xf]
    %v230 = vld [vmem:[%s217 + $0x30] sm:$0xf]
    %v231 = vld [vmem:[%s217 + $0x34] sm:$0xf]
    %v232 = vld [vmem:[%s217 + $0x38] sm:$0xf]
    %v233 = vld [vmem:[%s217 + $0x3c] sm:$0xf]
    %v234 = vld [vmem:[%s2 + $0x3] sm:$0x1]
    %v235 = vperm.slane %v234, 0
    %v252 = vunpack.c.l.b16 %v218
    %v253 = vunpack.c.l.b16 %v219
    %v254 = vunpack.c.l.b16 %v220
    %v255 = vunpack.c.l.b16 %v221
    %v256 = vunpack.c.l.b16 %v222
    %v257 = vunpack.c.l.b16 %v223
    %v258 = vunpack.c.l.b16 %v224
    %v259 = vunpack.c.l.b16 %v225
    %v260 = vunpack.c.l.b16 %v226
    %v261 = vunpack.c.l.b16 %v227
    %v262 = vunpack.c.l.b16 %v228
    %v263 = vunpack.c.l.b16 %v229
    %v264 = vunpack.c.l.b16 %v230
    %v265 = vunpack.c.l.b16 %v231
    %v266 = vunpack.c.l.b16 %v232
    %v267 = vunpack.c.l.b16 %v233
    %v268 = vpack.c.b16 %v253, %v252
    %v269 = vpack.c.b16 %v255, %v254
    %v270 = vpack.c.b16 %v257, %v256
    %v271 = vpack.c.b16 %v259, %v258
    %v272 = vpack.c.b16 %v261, %v260
    %v273 = vpack.c.b16 %v263, %v262
    %v274 = vpack.c.b16 %v265, %v264
    %v275 = vpack.c.b16 %v267, %v266
    %284 = vmatpush.bf16.msra.mxu0 %v275
    %285 = vmatpush.bf16.msra.mxu0 %v274
    %286 = vmatpush.bf16.msra.mxu0 %v273
    %287 = vmatpush.bf16.msra.mxu0 %v272
    %288 = vmatpush.bf16.msra.mxu0 %v271
    %289 = vmatpush.bf16.msra.mxu0 %v270
    %290 = vmatpush.bf16.msra.mxu0 %v269
    %291 = vmatpush.bf16.msra.mxu0 %v268
    %292 = vmatmul.bf16.gmra.mxu0 %v216
    %v293 = vpop.f32.mrf.mxu0
    %v294 = vadd.f32 %v235, %v293
    %v295 = vpop.f32.mrf.mxu0
    %296 = vdwg.mxu0
    %v297 = vmax.f32 %v294, 0.0
    %v298 = vpack.c.bf16 %v297, %v297
    %s299 = scalar_lea.vmem [#allocation2], 256
    %v300 = vld [vmem:[%s299] sm:$0xf]
    %v301 = vld [vmem:[%s299 + $0x4] sm:$0xf]
    %v302 = vld [vmem:[%s299 + $0x8] sm:$0xf]
    %v303 = vld [vmem:[%s299 + $0xc] sm:$0xf]
    %v304 = vld [vmem:[%s299 + $0x10] sm:$0xf]
    %v305 = vld [vmem:[%s299 + $0x14] sm:$0xf]
    %v306 = vld [vmem:[%s299 + $0x18] sm:$0xf]
    %v307 = vld [vmem:[%s299 + $0x1c] sm:$0xf]
    %v308 = vld [vmem:[%s299 + $0x20] sm:$0xf]
    %v309 = vld [vmem:[%s299 + $0x24] sm:$0xf]
    %v310 = vld [vmem:[%s299 + $0x28] sm:$0xf]
    %v311 = vld [vmem:[%s299 + $0x2c] sm:$0xf]
    %v312 = vld [vmem:[%s299 + $0x30] sm:$0xf]
    %v313 = vld [vmem:[%s299 + $0x34] sm:$0xf]
    %v314 = vld [vmem:[%s299 + $0x38] sm:$0xf]
    %v315 = vld [vmem:[%s299 + $0x3c] sm:$0xf]
    %v316 = vld [vmem:[%s2 + $0x4] sm:$0x1]
    %v317 = vperm.slane %v316, 0
    %v334 = vunpack.c.l.b16 %v300
    %v335 = vunpack.c.l.b16 %v301
    %v336 = vunpack.c.l.b16 %v302
    %v337 = vunpack.c.l.b16 %v303
    %v338 = vunpack.c.l.b16 %v304
    %v339 = vunpack.c.l.b16 %v305
    %v340 = vunpack.c.l.b16 %v306
    %v341 = vunpack.c.l.b16 %v307
    %v342 = vunpack.c.l.b16 %v308
    %v343 = vunpack.c.l.b16 %v309
    %v344 = vunpack.c.l.b16 %v310
    %v345 = vunpack.c.l.b16 %v311
    %v346 = vunpack.c.l.b16 %v312
    %v347 = vunpack.c.l.b16 %v313
    %v348 = vunpack.c.l.b16 %v314
    %v349 = vunpack.c.l.b16 %v315
    %v350 = vpack.c.b16 %v335, %v334
    %v351 = vpack.c.b16 %v337, %v336
    %v352 = vpack.c.b16 %v339, %v338
    %v353 = vpack.c.b16 %v341, %v340
    %v354 = vpack.c.b16 %v343, %v342
    %v355 = vpack.c.b16 %v345, %v344
    %v356 = vpack.c.b16 %v347, %v346
    %v357 = vpack.c.b16 %v349, %v348
    %366 = vmatpush.bf16.msra.mxu0 %v357
    %367 = vmatpush.bf16.msra.mxu0 %v356
    %368 = vmatpush.bf16.msra.mxu0 %v355
    %369 = vmatpush.bf16.msra.mxu0 %v354
    %370 = vmatpush.bf16.msra.mxu0 %v353
    %371 = vmatpush.bf16.msra.mxu0 %v352
    %372 = vmatpush.bf16.msra.mxu0 %v351
    %373 = vmatpush.bf16.msra.mxu0 %v350
    %374 = vmatmul.bf16.gmra.mxu0 %v298
    %v375 = vpop.f32.mrf.mxu0
    %v376 = vadd.f32 %v317, %v375
    %v377 = vpop.f32.mrf.mxu0
    %378 = vdwg.mxu0
    %vm379 = vcmask 64512
    %380 = vst.msk [vmem:[#allocation5] sm:$0xff] %vm379, %v376
    // Predicated region
    $region18: #{_pallas_forward.1} parent=1 // pred_check
      _
    $region19: #{_pallas_forward.1} parent=1 // pred_check_branch
      %382 = sbr.rel (0) target = $region21
    $region20: #{_pallas_forward.1} parent=1 // pred_region
      %384 = vsyncadd [#allocation4], 0
      %s386 = sshll.u32 [#allocation5], 4
      %s387 = int_to_ptr.vmem [resolvable:$true] %s386
      %s388 = sshll.u32 %s3, 4
      %s389 = int_to_ptr.hbm [resolvable:$true] %s388
      %391 = dma.vmem_to_hbm [thread:$0]  %s387, 128, %s389, [#allocation4]
    $region21: #{_pallas_forward.1} parent=1 // pred_fallthru
      _
    // Predicated region
    $region22: #{_pallas_forward.1} parent=1 // pred_check
      _
    $region23: #{_pallas_forward.1} parent=1 // pred_check_branch
      %393 = sbr.rel (0) target = $region25
    $region24: #{_pallas_forward.1} parent=1 // pred_region
      %395 = dma.done [#allocation4], 128
    $region25: #{_pallas_forward.1} parent=1 // pred_fallthru
      _
    %396 = vsyncpa [#allocation3], 1
    %397 = vsyncpa [#allocation4], 1

</llo_original>
